<compile_context>
chip_gen: v6e
topology: v6e:2x2x1
jax: 0.10.0
libtpu: 0.0.40
codegen_flags: <defaults>
</compile_context>

<pallas_src>
import numpy as np
import jax
import jax.numpy as jnp
from jax import lax
from jax.experimental import pallas as pl
from jax.experimental.pallas import tpu as pltpu

SQRT_HALF = 0.7071067811865476


def _erf(x):
    # Abramowitz & Stegun 7.1.26 polynomial (|err| < 1.5e-7); exp + elementwise only.
    # Kept exact: the tensor is only [TB, d_out], VALU cost is negligible and the
    # result stays well inside the 1e-4 comparison tolerance against torch's erf.
    a1, a2, a3, a4, a5 = 0.254829592, -0.284496736, 1.421413741, -1.453152027, 1.061405429
    p = 0.3275911
    sgn = jnp.where(x >= 0.0, 1.0, -1.0)
    ax = jnp.abs(x)
    t = 1.0 / (1.0 + p * ax)
    poly = ((((a5 * t + a4) * t + a3) * t + a2) * t + a1) * t
    return sgn * (1.0 - poly * jnp.exp(-ax * ax))


def _gelu_exact(x):
    # Matches torch.nn.functional.gelu default (erf-based).
    return 0.5 * x * (1.0 + _erf(x * SQRT_HALF))


def projection_kernel(x_ref,                 # VMEM [TB, d_in]   pooled hidden states
                      w1_ref, w2_ref,        # VMEM weights (resident, single-buffered)
                      gamma_ref, beta_ref,   # VMEM [1, d_out]   LayerNorm params
                      out_ref):              # VMEM [TB, d_out]
    x = x_ref[...]

    # --- Projection head -----------------------------------------------------
    e1 = jnp.dot(x, w1_ref[...], preferred_element_type=jnp.float32)            # [TB, d_out]
    e2 = jnp.dot(_gelu_exact(e1), w2_ref[...], preferred_element_type=jnp.float32)
    # TODO(synk): Dropout(p=0.5) is identity here (eval mode); training-mode masking not implemented.
    y = e1 + e2

    # LayerNorm(d_out), eps=1e-5
    mean = jnp.mean(y, axis=-1, keepdims=True)
    var = jnp.mean(jnp.square(y - mean), axis=-1, keepdims=True)
    normed = (y - mean) * lax.rsqrt(var + 1e-5)
    out_ref[...] = (normed * gamma_ref[...] + beta_ref[...]).astype(out_ref.dtype)


def text_encoder_forward(input_ids, hidden_states, w1, w2, gamma, beta, *, tb=256):
    B, S = input_ids.shape
    d_in = hidden_states.shape[-1]
    d_out = w1.shape[-1]

    # --- pooling ('gpt' branch), done in the wrapper -------------------------
    # sequence_lengths = torch.ne(input_ids, 0).sum(-1) - 1 ; wrap -1 -> S-1 like torch.
    # Only the B selected rows of hidden_states are read (same HBM traffic as the
    # previous in-kernel DMA gather), and the result becomes a regular VMEM input
    # that BlockSpec double-buffers automatically.
    lens = jnp.sum((input_ids != 0).astype(jnp.int32), axis=-1) - 1
    lens = jnp.where(lens < 0, lens + S, lens)
    pooled = hidden_states[jnp.arange(B), lens]                                  # [B, d_in]

    # --- batch tiling: TB is a multiple of 8 sublanes, clamped to padded batch
    tb = int(max(8, min(tb, ((B + 7) // 8) * 8)))
    bp = ((B + tb - 1) // tb) * tb
    if bp != B:
        pooled = jnp.pad(pooled, ((0, bp - B), (0, 0)))   # zero rows; sliced off below

    gamma2d = gamma.reshape(1, d_out)
    beta2d = beta.reshape(1, d_out)

    out = pl.pallas_call(
        projection_kernel,
        out_shape=jax.ShapeDtypeStruct((bp, d_out), jnp.float32),
        grid=(bp // tb,),
        in_specs=[
            # pooled activations: auto-pipelined batch tiles
            pl.BlockSpec((tb, d_in), lambda i: (i, 0)),
            # resident weights: constant block index -> single-buffer to halve VMEM
            pl.BlockSpec((d_in, d_out), lambda i: (0, 0), pipeline_mode=pl.Buffered(1)),
            pl.BlockSpec((d_out, d_out), lambda i: (0, 0), pipeline_mode=pl.Buffered(1)),
            # LayerNorm params (tiny)
            pl.BlockSpec((1, d_out), lambda i: (0, 0)),
            pl.BlockSpec((1, d_out), lambda i: (0, 0)),
        ],
        out_specs=pl.BlockSpec((tb, d_out), lambda i: (i, 0)),
        compiler_params=pltpu.CompilerParams(
            dimension_semantics=("parallel",)),
        cost_estimate=pl.CostEstimate(
            flops=2 * bp * d_out * (d_in + d_out),
            transcendentals=bp * d_out,
            bytes_accessed=4 * (bp * d_in + d_in * d_out + d_out * d_out
                                + 2 * d_out + bp * d_out),
        ),
    )(pooled, w1, w2, gamma2d, beta2d)
    return out[:B]


def reference_forward(input_ids, hidden_states, w1, w2, gamma, beta):
    # Plain-JAX reference mirroring the PyTorch semantics.
    B, S = input_ids.shape
    lens = jnp.sum((input_ids != 0).astype(jnp.int32), axis=-1) - 1
    lens = jnp.where(lens < 0, lens + S, lens)           # torch wraps -1 to last position
    pooled = hidden_states[jnp.arange(B), lens]
    e1 = pooled @ w1
    e2 = jax.nn.gelu(e1, approximate=False) @ w2         # dropout = identity (eval)
    y = e1 + e2
    mean = jnp.mean(y, axis=-1, keepdims=True)
    var = jnp.mean(jnp.square(y - mean), axis=-1, keepdims=True)
    return (y - mean) / jnp.sqrt(var + 1e-5) * gamma + beta


if __name__ == "__main__":
    B, S = 16, 16
    D_IN = 128    # stand-in for transformer_embed_dim (lane-aligned)
    D_OUT = 128   # d_proj of the Projection head (lane-dense output stores)

    key = jax.random.PRNGKey(0)
    k_ids, k_hid, k_w1, k_w2 = jax.random.split(key, 4)

    # Token ids: nonzero tokens followed by zero padding (varying lengths per row).
    ids = jax.random.randint(k_ids, (B, S), 1, 1000, dtype=jnp.int32)
    lengths = (jnp.arange(B, dtype=jnp.int32) % S) + 1           # 1..16, deterministic
    pos = jnp.arange(S, dtype=jnp.int32)[None, :]
    input_ids = jnp.where(pos < lengths[:, None], ids, 0)

    # "Base model" output hidden states (the GPT transformer itself is out of scope).
    hidden_states = jax.random.normal(k_hid, (B, S, D_IN), dtype=jnp.float32)

    # Projection parameters (linear weights stored as [in, out] = torch weight.T).
    w1 = jax.random.normal(k_w1, (D_IN, D_OUT), dtype=jnp.float32) * 0.05
    w2 = jax.random.normal(k_w2, (D_OUT, D_OUT), dtype=jnp.float32) * 0.05
    gamma = jnp.ones((D_OUT,), dtype=jnp.float32)   # nn.LayerNorm default weight
    beta = jnp.zeros((D_OUT,), dtype=jnp.float32)   # nn.LayerNorm default bias

    out = text_encoder_forward(input_ids, hidden_states, w1, w2, gamma, beta)
    out = jax.block_until_ready(out)

    ref = reference_forward(input_ids, hidden_states, w1, w2, gamma, beta)
    np.testing.assert_allclose(np.asarray(out), np.asarray(ref), rtol=1e-4, atol=1e-4)

    print("KERNEL_OK")
</pallas_src>

<mosaic_0001>
module attributes {stable_mosaic.version = 11 : i64} {
  func.func @projection_kernel(%arg0: i32, %arg1: memref<16x128xf32, #tpu.memory_space<vmem>>, %arg2: memref<128x128xf32, #tpu.memory_space<vmem>>, %arg3: memref<128x128xf32, #tpu.memory_space<vmem>>, %arg4: memref<1x128xf32, #tpu.memory_space<vmem>>, %arg5: memref<1x128xf32, #tpu.memory_space<vmem>>, %arg6: memref<16x128xf32, #tpu.memory_space<vmem>>) attributes {dimension_semantics = [#tpu.dimension_semantics<parallel>], iteration_bounds = array<i64: 1>, scalar_prefetch = 0 : i64, scratch_operands = 0 : i64, tpu.core_type = #tpu.core_type<tc>, window_params = [{transform_indices = @transform_0, window_bounds = array<i64: 16, 128>}, {pipeline_mode = #tpu.pipeline_mode<synchronous>, transform_indices = @transform_1, window_bounds = array<i64: 128, 128>}, {pipeline_mode = #tpu.pipeline_mode<synchronous>, transform_indices = @transform_2, window_bounds = array<i64: 128, 128>}, {pipeline_mode = #tpu.pipeline_mode<synchronous>, transform_indices = @transform_3, window_bounds = array<i64: 1, 128>}, {pipeline_mode = #tpu.pipeline_mode<synchronous>, transform_indices = @transform_4, window_bounds = array<i64: 1, 128>}, {transform_indices = @transform_5, window_bounds = array<i64: 16, 128>}]} {
    %c0 = arith.constant 0 : index
    %c0_0 = arith.constant 0 : index
    %0 = vector.load %arg1[%c0, %c0_0] : memref<16x128xf32, #tpu.memory_space<vmem>>, vector<16x128xf32>
    %c0_1 = arith.constant 0 : index
    %c0_2 = arith.constant 0 : index
    %1 = vector.load %arg2[%c0_1, %c0_2] : memref<128x128xf32, #tpu.memory_space<vmem>>, vector<128x128xf32>
    %cst = arith.constant dense<0.000000e+00> : vector<16x128xf32>
    %2 = tpu.matmul %0, %1, %cst {dimension_numbers = #tpu.dot_dimension_numbers<[1], [0], [0], [1], [0, 0, 1, 1], [], []>} : vector<16x128xf32>, vector<128x128xf32>, vector<16x128xf32> -> vector<16x128xf32>
    %cst_3 = arith.constant 5.000000e-01 : f32
    %3 = vector.broadcast %cst_3 : f32 to vector<16x128xf32>
    %4 = arith.mulf %3, %2 : vector<16x128xf32>
    %cst_4 = arith.constant 0.707106769 : f32
    %5 = vector.broadcast %cst_4 : f32 to vector<16x128xf32>
    %6 = arith.mulf %2, %5 : vector<16x128xf32>
    %cst_5 = arith.constant 0.000000e+00 : f32
    %7 = vector.broadcast %cst_5 : f32 to vector<16x128xf32>
    %8 = arith.cmpf oge, %6, %7 : vector<16x128xf32>
    %cst_6 = arith.constant 1.000000e+00 : f32
    %cst_7 = arith.constant -1.000000e+00 : f32
    %9 = vector.broadcast %cst_6 : f32 to vector<16x128xf32>
    %10 = vector.broadcast %cst_7 : f32 to vector<16x128xf32>
    %11 = arith.select %8, %9, %10 : vector<16x128xi1>, vector<16x128xf32>
    %12 = math.absf %6 : vector<16x128xf32>
    %cst_8 = arith.constant 0.327591091 : f32
    %13 = vector.broadcast %cst_8 : f32 to vector<16x128xf32>
    %14 = arith.mulf %13, %12 : vector<16x128xf32>
    %cst_9 = arith.constant 1.000000e+00 : f32
    %15 = vector.broadcast %cst_9 : f32 to vector<16x128xf32>
    %16 = arith.addf %15, %14 : vector<16x128xf32>
    %cst_10 = arith.constant 1.000000e+00 : f32
    %17 = vector.broadcast %cst_10 : f32 to vector<16x128xf32>
    %18 = arith.divf %17, %16 : vector<16x128xf32>
    %cst_11 = arith.constant 1.06140542 : f32
    %19 = vector.broadcast %cst_11 : f32 to vector<16x128xf32>
    %20 = arith.mulf %19, %18 : vector<16x128xf32>
    %cst_12 = arith.constant -1.45315206 : f32
    %21 = vector.broadcast %cst_12 : f32 to vector<16x128xf32>
    %22 = arith.addf %20, %21 : vector<16x128xf32>
    %23 = arith.mulf %22, %18 : vector<16x128xf32>
    %cst_13 = arith.constant 1.42141378 : f32
    %24 = vector.broadcast %cst_13 : f32 to vector<16x128xf32>
    %25 = arith.addf %23, %24 : vector<16x128xf32>
    %26 = arith.mulf %25, %18 : vector<16x128xf32>
    %cst_14 = arith.constant -0.284496725 : f32
    %27 = vector.broadcast %cst_14 : f32 to vector<16x128xf32>
    %28 = arith.addf %26, %27 : vector<16x128xf32>
    %29 = arith.mulf %28, %18 : vector<16x128xf32>
    %cst_15 = arith.constant 0.254829586 : f32
    %30 = vector.broadcast %cst_15 : f32 to vector<16x128xf32>
    %31 = arith.addf %29, %30 : vector<16x128xf32>
    %32 = arith.mulf %31, %18 : vector<16x128xf32>
    %cst_16 = arith.constant 0.000000e+00 : f32
    %33 = vector.broadcast %cst_16 : f32 to vector<16x128xf32>
    %34 = arith.subf %33, %12 : vector<16x128xf32>
    %35 = arith.mulf %34, %12 : vector<16x128xf32>
    %36 = math.exp %35 : vector<16x128xf32>
    %37 = arith.mulf %32, %36 : vector<16x128xf32>
    %cst_17 = arith.constant 1.000000e+00 : f32
    %38 = vector.broadcast %cst_17 : f32 to vector<16x128xf32>
    %39 = arith.subf %38, %37 : vector<16x128xf32>
    %40 = arith.mulf %11, %39 : vector<16x128xf32>
    %cst_18 = arith.constant 1.000000e+00 : f32
    %41 = vector.broadcast %cst_18 : f32 to vector<16x128xf32>
    %42 = arith.addf %41, %40 : vector<16x128xf32>
    %43 = arith.mulf %4, %42 : vector<16x128xf32>
    %c0_19 = arith.constant 0 : index
    %c0_20 = arith.constant 0 : index
    %44 = vector.load %arg3[%c0_19, %c0_20] : memref<128x128xf32, #tpu.memory_space<vmem>>, vector<128x128xf32>
    %cst_21 = arith.constant dense<0.000000e+00> : vector<16x128xf32>
    %45 = tpu.matmul %43, %44, %cst_21 {dimension_numbers = #tpu.dot_dimension_numbers<[1], [0], [0], [1], [0, 0, 1, 1], [], []>} : vector<16x128xf32>, vector<128x128xf32>, vector<16x128xf32> -> vector<16x128xf32>
    %46 = arith.addf %2, %45 : vector<16x128xf32>
    %cst_22 = arith.constant dense<0.000000e+00> : vector<16xf32>
    %47 = vector.multi_reduction <add>, %46, %cst_22 [1] : vector<16x128xf32> to vector<16xf32>
    %48 = vector.shape_cast %47 : vector<16xf32> to vector<16x1xf32>
    %cst_23 = arith.constant 1.280000e+02 : f32
    %49 = vector.broadcast %cst_23 : f32 to vector<16x1xf32>
    %50 = arith.divf %48, %49 : vector<16x1xf32>
    %51 = vector.broadcast %50 : vector<16x1xf32> to vector<16x128xf32>
    %52 = arith.subf %46, %51 : vector<16x128xf32>
    %53 = arith.mulf %52, %52 : vector<16x128xf32>
    %cst_24 = arith.constant dense<0.000000e+00> : vector<16xf32>
    %54 = vector.multi_reduction <add>, %53, %cst_24 [1] : vector<16x128xf32> to vector<16xf32>
    %55 = vector.shape_cast %54 : vector<16xf32> to vector<16x1xf32>
    %cst_25 = arith.constant 1.280000e+02 : f32
    %56 = vector.broadcast %cst_25 : f32 to vector<16x1xf32>
    %57 = arith.divf %55, %56 : vector<16x1xf32>
    %58 = vector.broadcast %50 : vector<16x1xf32> to vector<16x128xf32>
    %59 = arith.subf %46, %58 : vector<16x128xf32>
    %cst_26 = arith.constant 9.99999974E-6 : f32
    %60 = vector.broadcast %cst_26 : f32 to vector<16x1xf32>
    %61 = arith.addf %57, %60 : vector<16x1xf32>
    %62 = math.rsqrt %61 : vector<16x1xf32>
    %63 = vector.broadcast %62 : vector<16x1xf32> to vector<16x128xf32>
    %64 = arith.mulf %59, %63 : vector<16x128xf32>
    %c0_27 = arith.constant 0 : index
    %c0_28 = arith.constant 0 : index
    %65 = vector.load %arg4[%c0_27, %c0_28] : memref<1x128xf32, #tpu.memory_space<vmem>>, vector<1x128xf32>
    %66 = vector.broadcast %65 : vector<1x128xf32> to vector<16x128xf32>
    %67 = arith.mulf %64, %66 : vector<16x128xf32>
    %c0_29 = arith.constant 0 : index
    %c0_30 = arith.constant 0 : index
    %68 = vector.load %arg5[%c0_29, %c0_30] : memref<1x128xf32, #tpu.memory_space<vmem>>, vector<1x128xf32>
    %69 = vector.broadcast %68 : vector<1x128xf32> to vector<16x128xf32>
    %70 = arith.addf %67, %69 : vector<16x128xf32>
    %c0_31 = arith.constant 0 : index
    %c0_32 = arith.constant 0 : index
    %71 = vector.load %arg6[%c0_31, %c0_32] : memref<16x128xf32, #tpu.memory_space<vmem>>, vector<16x128xf32>
    tpu.vector_store %arg6[%c0_31, %c0_32], %70 {strides = array<i32>} : memref<16x128xf32, #tpu.memory_space<vmem>>, vector<16x128xf32>,
    return
  }
  func.func @transform_0(%arg0: i32) -> (i32, i32) {
    %c0_i32 = arith.constant 0 : i32
    %c0_i32_0 = arith.constant 0 : i32
    return %arg0, %c0_i32 : i32, i32
  }
  func.func @transform_1(%arg0: i32) -> (i32, i32) {
    %c0_i32 = arith.constant 0 : i32
    %c0_i32_0 = arith.constant 0 : i32
    %c0_i32_1 = arith.constant 0 : i32
    return %c0_i32, %c0_i32_0 : i32, i32
  }
  func.func @transform_2(%arg0: i32) -> (i32, i32) {
    %c0_i32 = arith.constant 0 : i32
    %c0_i32_0 = arith.constant 0 : i32
    %c0_i32_1 = arith.constant 0 : i32
    return %c0_i32, %c0_i32_0 : i32, i32
  }
  func.func @transform_3(%arg0: i32) -> (i32, i32) {
    %c0_i32 = arith.constant 0 : i32
    %c0_i32_0 = arith.constant 0 : i32
    %c0_i32_1 = arith.constant 0 : i32
    return %c0_i32, %c0_i32_0 : i32, i32
  }
  func.func @transform_4(%arg0: i32) -> (i32, i32) {
    %c0_i32 = arith.constant 0 : i32
    %c0_i32_0 = arith.constant 0 : i32
    %c0_i32_1 = arith.constant 0 : i32
    return %c0_i32, %c0_i32_0 : i32, i32
  }
  func.func @transform_5(%arg0: i32) -> (i32, i32) {
    %c0_i32 = arith.constant 0 : i32
    %c0_i32_0 = arith.constant 0 : i32
    return %arg0, %c0_i32 : i32, i32
  }
}

</mosaic_0001>

<llo_original>
// kernel: tpu_custom_call.1
$region0: #{tpu_custom_call.1}
  #allocation0 [shape = 'u32[]', space=smem, size = 0x4, offset = 0x4, fixed_abs, tag = 'smem constant byte address 0x4 - core index']
  #allocation1 [shape = 'u32[144,128]{1,0:T(1,128)}', space=vmem, size = 0x12000, scoped, tag = 'internal scratch']
  %s0 = inlined_call_operand.hbm [shape: f32[16,128], index: 0, kind: input, shape index: {}]
  %s1 = inlined_call_operand.hbm [shape: f32[128,128], index: 1, kind: input, shape index: {}]
  %s2 = inlined_call_operand.hbm [shape: f32[128,128], index: 2, kind: input, shape index: {}]
  %s3 = inlined_call_operand.vmem [shape: f32[1,128], index: 3, kind: input, shape index: {}]
  %s4 = inlined_call_operand.vmem [shape: f32[1,128], index: 4, kind: input, shape index: {}]
  %s5 = inlined_call_operand.hbm [shape: f32[16,128], index: 5, kind: output, shape index: {}]
  %s6 = sld [smem:[#allocation0]]
  $region42: #{tpu_custom_call.1} parent=0
    _
  %s8 = ssub.s32 1, %s6
  %s9 = scalar_select 0, %s8, %s6
  $region1: #{tpu_custom_call.1} parent=0
    #allocation2 [shape = 'u8[8192]{0}', space=vmem, size = 0x2000, scoped, tag = 'input window, operand 0, single buffered']
    #allocation3 [shape = 's32[1]{0}', space=sflag, size = 0x4, scoped, tag = 'scoped memory for tpu_custom_call.1']
    #allocation4 [shape = 's32[1]{0}', space=sflag, size = 0x4, scoped, tag = 'scoped memory for tpu_custom_call.1']
    #allocation5 [shape = 'u8[65536]{0}', space=vmem, size = 0x10000, scoped, tag = 'input window, operand 1, single buffered']
    #allocation6 [shape = 's32[1]{0}', space=sflag, size = 0x4, scoped, tag = 'scoped memory for tpu_custom_call.1']
    #allocation7 [shape = 'u8[65536]{0}', space=vmem, size = 0x10000, scoped, tag = 'input window, operand 2, single buffered']
    #allocation8 [shape = 'u8[8192]{0}', space=vmem, size = 0x2000, scoped, tag = 'output window, operand 0, single buffered']
    %10 = vsyncpa [#allocation3], 0
    %11 = vsyncpa [#allocation6], 0
    %12 = vsyncpa [#allocation4], 0
    // Predicated region
    $region2: #{tpu_custom_call.1} parent=1 // pred_check
      _
    $region3: #{tpu_custom_call.1} parent=1 // pred_check_branch
      %14 = sbr.rel (0) target = $region5
    $region4: #{tpu_custom_call.1} parent=1 // pred_region
      %s16 = ssub.s32 256, 256
      %17 = vsyncadd [#allocation3], %s16
      %s18 = sshll.u32 [#allocation2], 4
      %s19 = int_to_ptr.vmem [resolvable:$true] %s18
      %24 = dma.hbm_to_vmem [thread:$0]  %s0, 256, %s19, [#allocation3], 128, 128, 8
    $region5: #{tpu_custom_call.1} parent=1 // pred_fallthru
      _
    // Predicated region
    $region6: #{tpu_custom_call.1} parent=1 // pred_check
      _
    $region7: #{tpu_custom_call.1} parent=1 // pred_check_branch
      %26 = sbr.rel (0) target = $region9
    $region8: #{tpu_custom_call.1} parent=1 // pred_region
      %s28 = ssub.s32 2048, 2048
      %29 = vsyncadd [#allocation6], %s28
      %s30 = sshll.u32 [#allocation5], 4
      %s31 = int_to_ptr.vmem [resolvable:$true] %s30
      %36 = dma.hbm_to_vmem [thread:$0]  %s1, 2048, %s31, [#allocation6], 128, 128, 8
    $region9: #{tpu_custom_call.1} parent=1 // pred_fallthru
      _
    // Predicated region
    $region10: #{tpu_custom_call.1} parent=1 // pred_check
      _
    $region11: #{tpu_custom_call.1} parent=1 // pred_check_branch
      %38 = sbr.rel (0) target = $region13
    $region12: #{tpu_custom_call.1} parent=1 // pred_region
      %s40 = ssub.s32 2048, 2048
      %41 = vsyncadd [#allocation6], %s40
      %s42 = sshll.u32 [#allocation7], 4
      %s43 = int_to_ptr.vmem [resolvable:$true] %s42
      %48 = dma.hbm_to_vmem [thread:$0]  %s2, 2048, %s43, [#allocation6], 128, 128, 8
    $region13: #{tpu_custom_call.1} parent=1 // pred_fallthru
      _
    // Predicated region
    $region14: #{tpu_custom_call.1} parent=1 // pred_check
      _
    $region15: #{tpu_custom_call.1} parent=1 // pred_check_branch
      %50 = sbr.rel (0) target = $region17
    $region16: #{tpu_custom_call.1} parent=1 // pred_region
      _
    $region17: #{tpu_custom_call.1} parent=1 // pred_fallthru
      _
    // Predicated region
    $region18: #{tpu_custom_call.1} parent=1 // pred_check
      _
    $region19: #{tpu_custom_call.1} parent=1 // pred_check_branch
      %52 = sbr.rel (0) target = $region21
    $region20: #{tpu_custom_call.1} parent=1 // pred_region
      _
    $region21: #{tpu_custom_call.1} parent=1 // pred_fallthru
      _
    // Predicated region
    $region22: #{tpu_custom_call.1} parent=1 // pred_check
      _
    $region23: #{tpu_custom_call.1} parent=1 // pred_check_branch
      %54 = sbr.rel (0) target = $region25
    $region24: #{tpu_custom_call.1} parent=1 // pred_region
      %55 = dma.done [#allocation3], 256
    $region25: #{tpu_custom_call.1} parent=1 // pred_fallthru
      _
    // Predicated region
    $region26: #{tpu_custom_call.1} parent=1 // pred_check
      _
    $region27: #{tpu_custom_call.1} parent=1 // pred_check_branch
      %57 = sbr.rel (0) target = $region29
    $region28: #{tpu_custom_call.1} parent=1 // pred_region
      %58 = dma.done [#allocation6], 2048
    $region29: #{tpu_custom_call.1} parent=1 // pred_fallthru
      _
    // Predicated region
    $region30: #{tpu_custom_call.1} parent=1 // pred_check
      _
    $region31: #{tpu_custom_call.1} parent=1 // pred_check_branch
      %60 = sbr.rel (0) target = $region33
    $region32: #{tpu_custom_call.1} parent=1 // pred_region
      %61 = dma.done [#allocation6], 2048
    $region33: #{tpu_custom_call.1} parent=1 // pred_fallthru
      _
    %v62 = vld [vmem:[#allocation2] sm:$0xff]
    %v63 = vld [vmem:[#allocation2 + $0x8] sm:$0xff]
    %v64 = vld [vmem:[#allocation5] sm:$0xff]
    %v65 = vld [vmem:[#allocation5 + $0x8] sm:$0xff]
    %v66 = vld [vmem:[#allocation5 + $0x10] sm:$0xff]
    %v67 = vld [vmem:[#allocation5 + $0x18] sm:$0xff]
    %v68 = vld [vmem:[#allocation5 + $0x20] sm:$0xff]
    %v69 = vld [vmem:[#allocation5 + $0x28] sm:$0xff]
    %v70 = vld [vmem:[#allocation5 + $0x30] sm:$0xff]
    %v71 = vld [vmem:[#allocation5 + $0x38] sm:$0xff]
    %v72 = vld [vmem:[#allocation5 + $0x40] sm:$0xff]
    %v73 = vld [vmem:[#allocation5 + $0x48] sm:$0xff]
    %v74 = vld [vmem:[#allocation5 + $0x50] sm:$0xff]
    %v75 = vld [vmem:[#allocation5 + $0x58] sm:$0xff]
    %v76 = vld [vmem:[#allocation5 + $0x60] sm:$0xff]
    %v77 = vld [vmem:[#allocation5 + $0x68] sm:$0xff]
    %v78 = vld [vmem:[#allocation5 + $0x70] sm:$0xff]
    %v79 = vld [vmem:[#allocation5 + $0x78] sm:$0xff]
    %80 = vmatprep.subr.mxu0 0.0
    %81 = vmatpush1.msra.mxu0 %v79
    %82 = vmatprep.subr.mxu0 0.0
    %83 = vmatpush1.msra.mxu0 %v78
    %84 = vmatprep.subr.mxu0 0.0
    %85 = vmatpush1.msra.mxu0 %v77
    %86 = vmatprep.subr.mxu0 0.0
    %87 = vmatpush1.msra.mxu0 %v76
    %88 = vmatprep.subr.mxu0 0.0
    %89 = vmatpush1.msra.mxu0 %v75
    %90 = vmatprep.subr.mxu0 0.0
    %91 = vmatpush1.msra.mxu0 %v74
    %92 = vmatprep.subr.mxu0 0.0
    %93 = vmatpush1.msra.mxu0 %v73
    %94 = vmatprep.subr.mxu0 0.0
    %95 = vmatpush1.msra.mxu0 %v72
    %96 = vmatprep.subr.mxu0 0.0
    %97 = vmatpush1.msra.mxu0 %v71
    %98 = vmatprep.subr.mxu0 0.0
    %99 = vmatpush1.msra.mxu0 %v70
    %100 = vmatprep.subr.mxu0 0.0
    %101 = vmatpush1.msra.mxu0 %v69
    %102 = vmatprep.subr.mxu0 0.0
    %103 = vmatpush1.msra.mxu0 %v68
    %104 = vmatprep.subr.mxu0 0.0
    %105 = vmatpush1.msra.mxu0 %v67
    %106 = vmatprep.subr.mxu0 0.0
    %107 = vmatpush1.msra.mxu0 %v66
    %108 = vmatprep.subr.mxu0 0.0
    %109 = vmatpush1.msra.mxu0 %v65
    %110 = vmatprep.subr.mxu0 0.0
    %111 = vmatpush1.msra.mxu0 %v64
    %112 = vmatprep.subr.mxu0 0.0
    %113 = vmatpush2.msra.mxu0 0.0
    %114 = vmatprep.subr.mxu0 0.0
    %115 = vmatpush2.msra.mxu0 0.0
    %116 = vmatprep.subr.mxu0 0.0
    %117 = vmatpush2.msra.mxu0 0.0
    %118 = vmatprep.subr.mxu0 0.0
    %119 = vmatpush2.msra.mxu0 0.0
    %120 = vmatprep.subr.mxu0 0.0
    %121 = vmatpush2.msra.mxu0 0.0
    %122 = vmatprep.subr.mxu0 0.0
    %123 = vmatpush2.msra.mxu0 0.0
    %124 = vmatprep.subr.mxu0 0.0
    %125 = vmatpush2.msra.mxu0 0.0
    %126 = vmatprep.subr.mxu0 0.0
    %127 = vmatpush2.msra.mxu0 0.0
    %128 = vmatprep.subr.mxu0 0.0
    %129 = vmatpush2.msra.mxu0 0.0
    %130 = vmatprep.subr.mxu0 0.0
    %131 = vmatpush2.msra.mxu0 0.0
    %132 = vmatprep.subr.mxu0 0.0
    %133 = vmatpush2.msra.mxu0 0.0
    %134 = vmatprep.subr.mxu0 0.0
    %135 = vmatpush2.msra.mxu0 0.0
    %136 = vmatprep.subr.mxu0 0.0
    %137 = vmatpush2.msra.mxu0 0.0
    %138 = vmatprep.subr.mxu0 0.0
    %139 = vmatpush2.msra.mxu0 0.0
    %140 = vmatprep.subr.mxu0 0.0
    %141 = vmatpush2.msra.mxu0 0.0
    %142 = vmatprep.subr.mxu0 0.0
    %143 = vmatpush2.msra.mxu0 0.0
    %144 = vmatprep.mubr.f32.mxu0 0.0
    %145 = vmatmul.mubr.f32.gmra.mxu0 %v62
    %v146 = vpop.f32.mrf.mxu0
    %v147 = vadd.f32 0.0, %v146
    %v148 = vpop.f32.mrf.mxu0
    %149 = vmatprep.mubr.f32.mxu0 0.0
    %150 = vmatmul.mubr.f32.gmra.mxu0 %v63
    %v151 = vpop.f32.mrf.mxu0
    %v152 = vadd.f32 0.0, %v151
    %v153 = vpop.f32.mrf.mxu0
    %154 = vdwg.mxu0
    %v155 = vmul.f32 %v147, 0.5
    %v156 = vmul.f32 %v152, 0.5
    %v157 = vmul.f32 %v147, 0.70710677
    %v158 = vmul.f32 %v152, 0.70710677
    %vm159 = vcmp.ge.f32.partialorder %v157, 0.0
    %vm160 = vcmp.ge.f32.partialorder %v158, 0.0
    %v161 = vsel %vm159, 1.0, -1.0
    %v162 = vsel %vm160, 1.0, -1.0
    %v163 = vand.u32 2147483647, %v157
    %v164 = vand.u32 2147483647, %v158
    %v165 = vmul.f32 %v163, 0.3275911
    %v166 = vmul.f32 %v164, 0.3275911
    %v167 = vadd.f32 %v165, 1.0
    %v168 = vadd.f32 %v166, 1.0
    %v169 = vrcp.pop %v167
    %v170 = vmul.f32 1.0, %v169
    %v171 = vrcp.pop %v168
    %v172 = vmul.f32 1.0, %v171
    %v173 = vmul.f32 %v170, 1.0614054
    %v174 = vmul.f32 %v172, 1.0614054
    %v175 = vadd.f32 %v173, -1.4531521
    %v176 = vadd.f32 %v174, -1.4531521
    %v177 = vmul.f32 %v175, %v170
    %v178 = vmul.f32 %v176, %v172
    %v179 = vadd.f32 %v177, 1.4214138
    %v180 = vadd.f32 %v178, 1.4214138
    %v181 = vmul.f32 %v179, %v170
    %v182 = vmul.f32 %v180, %v172
    %v183 = vadd.f32 %v181, -0.28449672
    %v184 = vadd.f32 %v182, -0.28449672
    %v185 = vmul.f32 %v183, %v170
    %v186 = vmul.f32 %v184, %v172
    %v187 = vadd.f32 %v185, 0.2548296
    %v188 = vadd.f32 %v186, 0.2548296
    %v189 = vmul.f32 %v187, %v170
    %v190 = vmul.f32 %v188, %v172
    %v191 = vsub.f32 0.0, %v163
    %v192 = vsub.f32 0.0, %v164
    %v193 = vmul.f32 %v191, %v163
    %v194 = vmul.f32 %v192, %v164
    %v195 = vmul.f32 %v193, 1.442695
    %v196 = vpow.pop %v195
    %v197 = vmul.f32 %v194, 1.442695
    %v198 = vpow.pop %v197
    %v199 = vmul.f32 %v189, %v196
    %v200 = vmul.f32 %v190, %v198
    %v201 = vsub.f32 1.0, %v199
    %v202 = vsub.f32 1.0, %v200
    %v203 = vmul.f32 %v161, %v201
    %v204 = vmul.f32 %v162, %v202
    %v205 = vadd.f32 %v203, 1.0
    %v206 = vadd.f32 %v204, 1.0
    %v207 = vmul.f32 %v155, %v205
    %v208 = vmul.f32 %v156, %v206
    %v209 = vld [vmem:[#allocation7] sm:$0xff]
    %v210 = vld [vmem:[#allocation7 + $0x8] sm:$0xff]
    %v211 = vld [vmem:[#allocation7 + $0x10] sm:$0xff]
    %v212 = vld [vmem:[#allocation7 + $0x18] sm:$0xff]
    %v213 = vld [vmem:[#allocation7 + $0x20] sm:$0xff]
    %v214 = vld [vmem:[#allocation7 + $0x28] sm:$0xff]
    %v215 = vld [vmem:[#allocation7 + $0x30] sm:$0xff]
    %v216 = vld [vmem:[#allocation7 + $0x38] sm:$0xff]
    %v217 = vld [vmem:[#allocation7 + $0x40] sm:$0xff]
    %v218 = vld [vmem:[#allocation7 + $0x48] sm:$0xff]
    %v219 = vld [vmem:[#allocation7 + $0x50] sm:$0xff]
    %v220 = vld [vmem:[#allocation7 + $0x58] sm:$0xff]
    %v221 = vld [vmem:[#allocation7 + $0x60] sm:$0xff]
    %v222 = vld [vmem:[#allocation7 + $0x68] sm:$0xff]
    %v223 = vld [vmem:[#allocation7 + $0x70] sm:$0xff]
    %v224 = vld [vmem:[#allocation7 + $0x78] sm:$0xff]
    %225 = vmatprep.subr.mxu0 0.0
    %226 = vmatpush1.msra.mxu0 %v224
    %227 = vmatprep.subr.mxu0 0.0
    %228 = vmatpush1.msra.mxu0 %v223
    %229 = vmatprep.subr.mxu0 0.0
    %230 = vmatpush1.msra.mxu0 %v222
    %231 = vmatprep.subr.mxu0 0.0
    %232 = vmatpush1.msra.mxu0 %v221
    %233 = vmatprep.subr.mxu0 0.0
    %234 = vmatpush1.msra.mxu0 %v220
    %235 = vmatprep.subr.mxu0 0.0
    %236 = vmatpush1.msra.mxu0 %v219
    %237 = vmatprep.subr.mxu0 0.0
    %238 = vmatpush1.msra.mxu0 %v218
    %239 = vmatprep.subr.mxu0 0.0
    %240 = vmatpush1.msra.mxu0 %v217
    %241 = vmatprep.subr.mxu0 0.0
    %242 = vmatpush1.msra.mxu0 %v216
    %243 = vmatprep.subr.mxu0 0.0
    %244 = vmatpush1.msra.mxu0 %v215
    %245 = vmatprep.subr.mxu0 0.0
    %246 = vmatpush1.msra.mxu0 %v214
    %247 = vmatprep.subr.mxu0 0.0
    %248 = vmatpush1.msra.mxu0 %v213
    %249 = vmatprep.subr.mxu0 0.0
    %250 = vmatpush1.msra.mxu0 %v212
    %251 = vmatprep.subr.mxu0 0.0
    %252 = vmatpush1.msra.mxu0 %v211
    %253 = vmatprep.subr.mxu0 0.0
    %254 = vmatpush1.msra.mxu0 %v210
    %255 = vmatprep.subr.mxu0 0.0
    %256 = vmatpush1.msra.mxu0 %v209
    %257 = vmatprep.subr.mxu0 0.0
    %258 = vmatpush2.msra.mxu0 0.0
    %259 = vmatprep.subr.mxu0 0.0
    %260 = vmatpush2.msra.mxu0 0.0
    %261 = vmatprep.subr.mxu0 0.0
    %262 = vmatpush2.msra.mxu0 0.0
    %263 = vmatprep.subr.mxu0 0.0
    %264 = vmatpush2.msra.mxu0 0.0
    %265 = vmatprep.subr.mxu0 0.0
    %266 = vmatpush2.msra.mxu0 0.0
    %267 = vmatprep.subr.mxu0 0.0
    %268 = vmatpush2.msra.mxu0 0.0
    %269 = vmatprep.subr.mxu0 0.0
    %270 = vmatpush2.msra.mxu0 0.0
    %271 = vmatprep.subr.mxu0 0.0
    %272 = vmatpush2.msra.mxu0 0.0
    %273 = vmatprep.subr.mxu0 0.0
    %274 = vmatpush2.msra.mxu0 0.0
    %275 = vmatprep.subr.mxu0 0.0
    %276 = vmatpush2.msra.mxu0 0.0
    %277 = vmatprep.subr.mxu0 0.0
    %278 = vmatpush2.msra.mxu0 0.0
    %279 = vmatprep.subr.mxu0 0.0
    %280 = vmatpush2.msra.mxu0 0.0
    %281 = vmatprep.subr.mxu0 0.0
    %282 = vmatpush2.msra.mxu0 0.0
    %283 = vmatprep.subr.mxu0 0.0
    %284 = vmatpush2.msra.mxu0 0.0
    %285 = vmatprep.subr.mxu0 0.0
    %286 = vmatpush2.msra.mxu0 0.0
    %287 = vmatprep.subr.mxu0 0.0
    %288 = vmatpush2.msra.mxu0 0.0
    %289 = vmatprep.mubr.f32.mxu0 0.0
    %290 = vmatmul.mubr.f32.gmra.mxu0 %v207
    %v291 = vpop.f32.mrf.mxu0
    %v292 = vadd.f32 0.0, %v291
    %v293 = vpop.f32.mrf.mxu0
    %294 = vmatprep.mubr.f32.mxu0 0.0
    %295 = vmatmul.mubr.f32.gmra.mxu0 %v208
    %v296 = vpop.f32.mrf.mxu0
    %v297 = vadd.f32 0.0, %v296
    %v298 = vpop.f32.mrf.mxu0
    %299 = vdwg.mxu0
    %v300 = vadd.f32 %v147, %v292
    %v301 = vadd.f32 %v152, %v297
    %302 = vadd.xlane.f32.xlu0 %v300
    %v303 = vpop.xlane.xlu0 %302
    %304 = vadd.xlane.f32.xlu0 %v301
    %v305 = vpop.xlane.xlu0 %304
    %v306 = vrcp.pop 128.0
    %v307 = vmul.f32 %v303, %v306
    %v308 = vmul.f32 %v305, %v306
    %v309 = vsub.f32 %v300, %v307
    %v310 = vsub.f32 %v301, %v308
    %v311 = vmul.f32 %v309, %v309
    %v312 = vmul.f32 %v310, %v310
    %313 = vadd.xlane.f32.xlu0 %v311
    %v314 = vpop.xlane.xlu0 %313
    %315 = vadd.xlane.f32.xlu0 %v312
    %v316 = vpop.xlane.xlu0 %315
    %v317 = vmul.f32 %v314, %v306
    %v318 = vmul.f32 %v316, %v306
    %v319 = vadd.f32 %v317, 1e-05
    %v320 = vadd.f32 %v318, 1e-05
    %v321 = vrsqrt.pop %v319
    %v322 = vrsqrt.pop %v320
    %v323 = vmul.f32 %v309, %v321
    %v324 = vmul.f32 %v310, %v322
    %v325 = vld [vmem:[%s3] sm:$0x1]
    %v327 = vlaneseq
    %v328 = vshrl.u32 %v327, 7
    %v329 = vsub.s32 0, %v328
    %v330 = vrot.slane %v325, %v329
    %v332 = vmul.f32 %v323, %v330
    %v333 = vmul.f32 %v324, %v330
    %v334 = vld [vmem:[%s4] sm:$0x1]
    %v336 = vlaneseq
    %v337 = vshrl.u32 %v336, 7
    %v338 = vsub.s32 0, %v337
    %v339 = vrot.slane %v334, %v338
    %v341 = vadd.f32 %v332, %v339
    %v342 = vadd.f32 %v333, %v339
    %343 = vst [vmem:[#allocation8] sm:$0xff] %v341
    %344 = vst [vmem:[#allocation8 + $0x8] sm:$0xff] %v342
    // Predicated region
    $region34: #{tpu_custom_call.1} parent=1 // pred_check
      _
    $region35: #{tpu_custom_call.1} parent=1 // pred_check_branch
      %346 = sbr.rel (0) target = $region37
    $region36: #{tpu_custom_call.1} parent=1 // pred_region
      %s348 = ssub.s32 256, 256
      %349 = vsyncadd [#allocation4], %s348
      %s350 = sshll.u32 [#allocation8], 4
      %s351 = int_to_ptr.vmem [resolvable:$true] %s350
      %356 = dma.vmem_to_hbm [thread:$0]  %s351, 256, %s5, [#allocation4], 128, 128, 8
    $region37: #{tpu_custom_call.1} parent=1 // pred_fallthru
      _
    // Predicated region
    $region38: #{tpu_custom_call.1} parent=1 // pred_check
      _
    $region39: #{tpu_custom_call.1} parent=1 // pred_check_branch
      %358 = sbr.rel (0) target = $region41
    $region40: #{tpu_custom_call.1} parent=1 // pred_region
      %359 = dma.done [#allocation4], 256
    $region41: #{tpu_custom_call.1} parent=1 // pred_fallthru
      _
    %360 = vsyncpa [#allocation3], 1
    %361 = vsyncpa [#allocation6], 1
    %362 = vsyncpa [#allocation4], 1

</llo_original>
